<compile_context>
chip_gen: v6e
topology: v6e:2x2x1
jax: 0.10.0
libtpu: 0.0.40
codegen_flags: <defaults>
</compile_context>

<pallas_src>
import functools

import jax
import jax.numpy as jnp
from jax.experimental import pallas as pl
from jax.experimental.pallas import tpu as pltpu

LANE = 128   # lane-aligned slab width; assumes 2*hidden <= 128 and n_action + 1 <= 128
OUT_W = 8    # output slab lanes: 0=value, 1=logp, 2=action, 3=per-row entropy, 4..7=0


def _round_up(v, m):
    return ((v + m - 1) // m) * m


def policy_kernel(x_ref, w_ref, b_ref, out_ref, *, n_space, r1, n_action):
    lane_w = w_ref.shape[1]   # == LANE
    out_w = out_ref.shape[1]  # == OUT_W

    # Packed, lane-aligned parameter slabs (all f32; biases as 1-row slabs).
    w1 = w_ref[0:r1, :]                        # layer-1: [w1a | w1c] (cols 0..2H)
    w2 = w_ref[r1:r1 + lane_w, :]              # layer-2: block-diag(w2a, w2c)
    wh = w_ref[r1 + lane_w:r1 + 2 * lane_w, :] # heads:   [wd -> cols 0..A | wv -> col A]
    b1 = b_ref[0:1, :]
    b2 = b_ref[1:2, :]
    bh = b_ref[2:3, :]

    # x slab carries the bitcast action in column n_space; that column (and any padding
    # columns) hits zero weight rows, so it contributes exactly 0 to the matmul.
    x = x_ref[...]                                                      # (B, r1) f32
    h1 = jnp.tanh(jnp.dot(x, w1, preferred_element_type=jnp.float32) + b1)
    h2 = jnp.tanh(jnp.dot(h1, w2, preferred_element_type=jnp.float32) + b2)
    zh = jnp.dot(h2, wh, preferred_element_type=jnp.float32) + bh

    a = n_action
    logits = zh[:, :a]          # (B, A)
    value = zh[:, a:a + 1]      # (B, 1)
    bsz = logits.shape[0]

    # Numerically stable log-softmax.
    m = jnp.max(logits, axis=-1, keepdims=True)
    z = logits - m
    ez = jnp.exp(z)
    se = jnp.sum(ez, axis=-1, keepdims=True)
    log_probs = z - jnp.log(se)

    col = jax.lax.broadcasted_iota(jnp.int32, (bsz, a), 1)

    # dist.mode(): first maximal index (reuses the row max); clamp guards NaN rows.
    greedy = jnp.min(jnp.where(logits == m, col, a), axis=-1, keepdims=True)
    greedy = jnp.minimum(greedy, a - 1)

    # dist.log_probs(action): recover the action from the bitcast lane, one-hot gather.
    act = pltpu.bitcast(x, jnp.int32)[:, n_space:n_space + 1]           # (B, 1) int32
    onehot = (col == act).astype(jnp.float32)
    logp = jnp.sum(log_probs * onehot, axis=-1, keepdims=True)

    # Per-row entropy, exact: -(sum ez * log_probs) / se (batch mean in the wrapper).
    ent_row = -jnp.sum(ez * log_probs, axis=-1, keepdims=True) / se

    # Narrow lane-dense output slab: 0=value, 1=logp, 2=action, 3=entropy.
    lane = jax.lax.broadcasted_iota(jnp.int32, (bsz, out_w), 1)
    out = jnp.where(lane == 0, value, jnp.zeros((bsz, out_w), jnp.float32))
    out = jnp.where(lane == 1, logp, out)
    out = jnp.where(lane == 2, greedy.astype(jnp.float32), out)
    out = jnp.where(lane == 3, ent_row, out)
    out_ref[...] = out


def _default_block_b(b_total):
    """Core-aware / VMEM-safe batch tile.

    - small batch: one block (grid overhead dominates anyway)
    - medium/large: at least 2 blocks so ('parallel',) shards across v7x's 2 TensorCores
    - cap at 1024 rows (v5e 16 MiB scoped-VMEM safe; amortizes ~0.35 us/step elsewhere)
    """
    b_aligned = max(8, _round_up(b_total, 8))
    if b_aligned <= 512:
        return b_aligned
    half = _round_up(pl.cdiv(b_total, 2), 8)
    return min(1024, half)


def policy_forward(x, action, packed, *, block_b=None):
    """Returns (value [B,1], greedy action [B,1] int32, log-prob of `action` [B,1],
    mean entropy [1,1]) using the packed parameter slabs."""
    wslab, bslab = packed["wslab"], packed["bslab"]
    r1, n_space, n_action = packed["r1"], packed["n_space"], packed["n_action"]

    b_total = x.shape[0]
    if block_b is None:
        block_b = _default_block_b(b_total)
    num_blocks = pl.cdiv(b_total, block_b)
    b_pad = num_blocks * block_b

    # Fold the (bitcast) action into the x slab: a single input DMA stream carries both.
    act_bits = jax.lax.bitcast_convert_type(action.astype(jnp.int32), jnp.float32)
    x_slab = jnp.zeros((b_pad, r1), jnp.float32)
    x_slab = x_slab.at[:b_total, :n_space].set(x)
    x_slab = x_slab.at[:b_total, n_space:n_space + 1].set(act_bits)

    kernel = functools.partial(policy_kernel, n_space=n_space, r1=r1, n_action=n_action)
    out = pl.pallas_call(
        kernel,
        out_shape=jax.ShapeDtypeStruct((b_pad, OUT_W), jnp.float32),
        grid=(num_blocks,),
        in_specs=[
            pl.BlockSpec((block_b, r1), lambda i: (i, 0)),
            pl.BlockSpec(wslab.shape, lambda i: (0, 0)),   # weights resident in VMEM
            pl.BlockSpec(bslab.shape, lambda i: (0, 0)),
        ],
        out_specs=pl.BlockSpec((block_b, OUT_W), lambda i: (i, 0)),
        compiler_params=pltpu.CompilerParams(dimension_semantics=("parallel",)),
    )(x_slab, wslab, bslab)

    out = out[:b_total]
    value = out[:, 0:1]
    logp = out[:, 1:2]
    act = out[:, 2:3].astype(jnp.int32)
    ent = jnp.mean(out[:, 3]).reshape(1, 1)
    return value, act, logp, ent


def init_params(key, n_space, hidden, n_action):
    """Deterministic PyTorch-style Linear init: U(-1/sqrt(fan_in), 1/sqrt(fan_in))."""
    def linear(key, fan_in, fan_out):
        kw, kb = jax.random.split(key)
        bound = 1.0 / jnp.sqrt(float(fan_in))
        w = jax.random.uniform(kw, (fan_in, fan_out), jnp.float32, -bound, bound)
        b = jax.random.uniform(kb, (1, fan_out), jnp.float32, -bound, bound)
        return w, b

    keys = jax.random.split(key, 6)
    w1a, b1a = linear(keys[0], n_space, hidden)
    w2a, b2a = linear(keys[1], hidden, hidden)
    w1c, b1c = linear(keys[2], n_space, hidden)
    w2c, b2c = linear(keys[3], hidden, hidden)
    wv, bv = linear(keys[4], hidden, 1)
    wd, bd = linear(keys[5], hidden, n_action)
    return dict(w1a=w1a, b1a=b1a, w2a=w2a, b2a=b2a,
                w1c=w1c, b1c=b1c, w2c=w2c, b2c=b2c,
                wv=wv, bv=bv, wd=wd, bd=bd)


def pack_params(p, n_space, hidden, n_action):
    """Host-side (one-time) fusion of 12 small tensors into 2 lane-aligned f32 slabs."""
    h, a = hidden, n_action
    assert 2 * h <= LANE and a + 1 <= LANE
    # Layer-1 row count: n_space feature lanes + 1 action lane, rounded to the f32
    # sublane tile (8). Rows >= n_space carry zero weights (action lane contributes 0).
    r1 = _round_up(n_space + 1, 8)

    w1 = jnp.zeros((r1, LANE), jnp.float32)
    w1 = w1.at[:n_space, :h].set(p["w1a"]).at[:n_space, h:2 * h].set(p["w1c"])

    w2 = jnp.zeros((LANE, LANE), jnp.float32)                 # block-diag(w2a, w2c)
    w2 = w2.at[:h, :h].set(p["w2a"]).at[h:2 * h, h:2 * h].set(p["w2c"])

    wh = jnp.zeros((LANE, LANE), jnp.float32)                 # [wd | wv] block structure
    wh = wh.at[:h, :a].set(p["wd"]).at[h:2 * h, a:a + 1].set(p["wv"])

    wslab = jnp.concatenate([w1, w2, wh], axis=0)             # f32: MXU has ample slack

    bslab = jnp.zeros((3, LANE), jnp.float32)
    bslab = bslab.at[0, :h].set(p["b1a"][0]).at[0, h:2 * h].set(p["b1c"][0])
    bslab = bslab.at[1, :h].set(p["b2a"][0]).at[1, h:2 * h].set(p["b2c"][0])
    bslab = bslab.at[2, :a].set(p["bd"][0]).at[2, a:a + 1].set(p["bv"][0])

    return dict(wslab=wslab, bslab=bslab, r1=r1, n_space=n_space, n_action=n_action)


def reference_forward(x, action, p):
    """Plain-JAX f32 reference of the module math."""
    def mm(a_, w_):
        return jnp.dot(a_, w_, preferred_element_type=jnp.float32,
                       precision=jax.lax.Precision.HIGHEST)

    ha = jnp.tanh(mm(x, p["w1a"]) + p["b1a"])
    ha = jnp.tanh(mm(ha, p["w2a"]) + p["b2a"])
    hc = jnp.tanh(mm(x, p["w1c"]) + p["b1c"])
    hc = jnp.tanh(mm(hc, p["w2c"]) + p["b2c"])
    value = mm(hc, p["wv"]) + p["bv"]
    logits = mm(ha, p["wd"]) + p["bd"]

    m = jnp.max(logits, axis=-1, keepdims=True)
    z = logits - m
    ez = jnp.exp(z)
    se = jnp.sum(ez, axis=-1, keepdims=True)
    logsm = z - jnp.log(se)
    probs = ez / se
    greedy = jnp.argmax(logits, axis=-1, keepdims=True).astype(jnp.int32)
    logp = jnp.take_along_axis(logsm, action, axis=-1)
    ent = jnp.mean(-jnp.sum(probs * logsm, axis=-1)).reshape(1, 1)
    return value, greedy, logp, ent


if __name__ == "__main__":
    B, N_SPACE, HIDDEN, N_ACTION = 8, 16, 32, 6

    key = jax.random.PRNGKey(0)
    k_params, k_x, k_a = jax.random.split(key, 3)

    params = init_params(k_params, N_SPACE, HIDDEN, N_ACTION)
    packed = pack_params(params, N_SPACE, HIDDEN, N_ACTION)
    x = jax.random.normal(k_x, (B, N_SPACE), jnp.float32)
    action = jax.random.randint(k_a, (B, 1), 0, N_ACTION, dtype=jnp.int32)

    value, act, logp, ent = policy_forward(x, action, packed)
    jax.block_until_ready((value, act, logp, ent))

    assert value.shape == (B, 1) and act.shape == (B, 1)
    assert logp.shape == (B, 1) and ent.shape == (1, 1)

    # Fidelity vs full-f32 module math (f32 matmuls in-kernel -> tight tolerances).
    rv, ra, rl, re = reference_forward(x, action, params)
    assert jnp.allclose(value, rv, rtol=2e-3, atol=2e-3)
    assert jnp.all(act == ra)
    assert jnp.allclose(logp, rl, rtol=2e-3, atol=2e-3)
    assert jnp.allclose(ent, re, rtol=2e-3, atol=2e-3)

    print("KERNEL_OK")
</pallas_src>

<mosaic_0001>
module attributes {stable_mosaic.version = 11 : i64} {
  func.func @policy_kernel(%arg0: i32, %arg1: memref<8x24xf32, #tpu.memory_space<vmem>>, %arg2: memref<280x128xf32, #tpu.memory_space<vmem>>, %arg3: memref<3x128xf32, #tpu.memory_space<vmem>>, %arg4: memref<8x8xf32, #tpu.memory_space<vmem>>) attributes {dimension_semantics = [#tpu.dimension_semantics<parallel>], iteration_bounds = array<i64: 1>, scalar_prefetch = 0 : i64, scratch_operands = 0 : i64, tpu.core_type = #tpu.core_type<tc>, window_params = [{transform_indices = @transform_0, window_bounds = array<i64: 8, 24>}, {pipeline_mode = #tpu.pipeline_mode<synchronous>, transform_indices = @transform_1, window_bounds = array<i64: 280, 128>}, {pipeline_mode = #tpu.pipeline_mode<synchronous>, transform_indices = @transform_2, window_bounds = array<i64: 3, 128>}, {transform_indices = @transform_3, window_bounds = array<i64: 8, 8>}]} {
    %c0 = arith.constant 0 : index
    %c0_0 = arith.constant 0 : index
    %0 = vector.load %arg2[%c0, %c0_0] : memref<280x128xf32, #tpu.memory_space<vmem>>, vector<24x128xf32>
    %c24 = arith.constant 24 : index
    %c0_1 = arith.constant 0 : index
    %1 = vector.load %arg2[%c24, %c0_1] : memref<280x128xf32, #tpu.memory_space<vmem>>, vector<128x128xf32>
    %c152 = arith.constant 152 : index
    %c0_2 = arith.constant 0 : index
    %2 = vector.load %arg2[%c152, %c0_2] : memref<280x128xf32, #tpu.memory_space<vmem>>, vector<128x128xf32>
    %c0_3 = arith.constant 0 : index
    %c0_4 = arith.constant 0 : index
    %3 = vector.load %arg3[%c0_3, %c0_4] : memref<3x128xf32, #tpu.memory_space<vmem>>, vector<1x128xf32>
    %c1 = arith.constant 1 : index
    %c0_5 = arith.constant 0 : index
    %4 = vector.load %arg3[%c1, %c0_5] : memref<3x128xf32, #tpu.memory_space<vmem>>, vector<1x128xf32>
    %c2 = arith.constant 2 : index
    %c0_6 = arith.constant 0 : index
    %5 = vector.load %arg3[%c2, %c0_6] : memref<3x128xf32, #tpu.memory_space<vmem>>, vector<1x128xf32>
    %c0_7 = arith.constant 0 : index
    %c0_8 = arith.constant 0 : index
    %6 = vector.load %arg1[%c0_7, %c0_8] : memref<8x24xf32, #tpu.memory_space<vmem>>, vector<8x24xf32>
    %cst = arith.constant dense<0.000000e+00> : vector<8x128xf32>
    %7 = tpu.matmul %6, %0, %cst {dimension_numbers = #tpu.dot_dimension_numbers<[1], [0], [0], [1], [0, 0, 1, 1], [], []>} : vector<8x24xf32>, vector<24x128xf32>, vector<8x128xf32> -> vector<8x128xf32>
    %8 = vector.broadcast %3 : vector<1x128xf32> to vector<8x128xf32>
    %9 = arith.addf %7, %8 : vector<8x128xf32>
    %10 = math.tanh %9 : vector<8x128xf32>
    %cst_9 = arith.constant dense<0.000000e+00> : vector<8x128xf32>
    %11 = tpu.matmul %10, %1, %cst_9 {dimension_numbers = #tpu.dot_dimension_numbers<[1], [0], [0], [1], [0, 0, 1, 1], [], []>} : vector<8x128xf32>, vector<128x128xf32>, vector<8x128xf32> -> vector<8x128xf32>
    %12 = vector.broadcast %4 : vector<1x128xf32> to vector<8x128xf32>
    %13 = arith.addf %11, %12 : vector<8x128xf32>
    %14 = math.tanh %13 : vector<8x128xf32>
    %cst_10 = arith.constant dense<0.000000e+00> : vector<8x128xf32>
    %15 = tpu.matmul %14, %2, %cst_10 {dimension_numbers = #tpu.dot_dimension_numbers<[1], [0], [0], [1], [0, 0, 1, 1], [], []>} : vector<8x128xf32>, vector<128x128xf32>, vector<8x128xf32> -> vector<8x128xf32>
    %16 = vector.broadcast %5 : vector<1x128xf32> to vector<8x128xf32>
    %17 = arith.addf %15, %16 : vector<8x128xf32>
    %18 = vector.extract_strided_slice %17 {offsets = [0, 0], sizes = [8, 6], strides = [1, 1]} : vector<8x128xf32> to vector<8x6xf32>
    %19 = vector.extract_strided_slice %17 {offsets = [0, 6], sizes = [8, 1], strides = [1, 1]} : vector<8x128xf32> to vector<8x1xf32>
    %cst_11 = arith.constant dense<0xFF800000> : vector<8xf32>
    %20 = vector.multi_reduction <maximumf>, %18, %cst_11 [1] : vector<8x6xf32> to vector<8xf32>
    %21 = vector.shape_cast %20 : vector<8xf32> to vector<8x1xf32>
    %22 = vector.broadcast %21 : vector<8x1xf32> to vector<8x6xf32>
    %23 = arith.subf %18, %22 : vector<8x6xf32>
    %24 = math.exp %23 : vector<8x6xf32>
    %cst_12 = arith.constant dense<0.000000e+00> : vector<8xf32>
    %25 = vector.multi_reduction <add>, %24, %cst_12 [1] : vector<8x6xf32> to vector<8xf32>
    %26 = vector.shape_cast %25 : vector<8xf32> to vector<8x1xf32>
    %27 = math.log %26 : vector<8x1xf32>
    %28 = vector.broadcast %27 : vector<8x1xf32> to vector<8x6xf32>
    %29 = arith.subf %23, %28 : vector<8x6xf32>
    %30 = tpu.iota {dimensions = array<i32: 1>} : vector<8x6xi32>
    %31 = vector.broadcast %21 : vector<8x1xf32> to vector<8x6xf32>
    %32 = arith.cmpf oeq, %18, %31 : vector<8x6xf32>
    %c6_i32 = arith.constant 6 : i32
    %33 = vector.broadcast %c6_i32 : i32 to vector<8x6xi32>
    %34 = arith.select %32, %30, %33 : vector<8x6xi1>, vector<8x6xi32>
    %cst_13 = arith.constant dense<2147483647> : vector<8xi32>
    %35 = vector.multi_reduction <minsi>, %34, %cst_13 [1] : vector<8x6xi32> to vector<8xi32>
    %36 = vector.shape_cast %35 : vector<8xi32> to vector<8x1xi32>
    %c5_i32 = arith.constant 5 : i32
    %37 = vector.broadcast %c5_i32 : i32 to vector<8x1xi32>
    %38 = arith.minsi %36, %37 : vector<8x1xi32>
    %39 = tpu.bitcast %6 : vector<8x24xf32> -> vector<8x24xi32>
    %40 = vector.extract_strided_slice %39 {offsets = [0, 16], sizes = [8, 1], strides = [1, 1]} : vector<8x24xi32> to vector<8x1xi32>
    %41 = vector.broadcast %40 : vector<8x1xi32> to vector<8x6xi32>
    %42 = arith.cmpi eq, %30, %41 : vector<8x6xi32>
    %43 = arith.extui %42 : vector<8x6xi1> to vector<8x6xi32>
    %44 = arith.sitofp %43 : vector<8x6xi32> to vector<8x6xf32>
    %45 = arith.mulf %29, %44 : vector<8x6xf32>
    %cst_14 = arith.constant dense<0.000000e+00> : vector<8xf32>
    %46 = vector.multi_reduction <add>, %45, %cst_14 [1] : vector<8x6xf32> to vector<8xf32>
    %47 = vector.shape_cast %46 : vector<8xf32> to vector<8x1xf32>
    %48 = arith.mulf %24, %29 : vector<8x6xf32>
    %cst_15 = arith.constant dense<0.000000e+00> : vector<8xf32>
    %49 = vector.multi_reduction <add>, %48, %cst_15 [1] : vector<8x6xf32> to vector<8xf32>
    %50 = vector.shape_cast %49 : vector<8xf32> to vector<8x1xf32>
    %cst_16 = arith.constant 0.000000e+00 : f32
    %51 = vector.broadcast %cst_16 : f32 to vector<8x1xf32>
    %52 = arith.subf %51, %50 : vector<8x1xf32>
    %53 = arith.divf %52, %26 : vector<8x1xf32>
    %54 = tpu.iota {dimensions = array<i32: 1>} : vector<8x8xi32>
    %c0_i32 = arith.constant 0 : i32
    %55 = vector.broadcast %c0_i32 : i32 to vector<8x8xi32>
    %56 = arith.cmpi eq, %54, %55 : vector<8x8xi32>
    %cst_17 = arith.constant 0.000000e+00 : f32
    %57 = vector.broadcast %cst_17 : f32 to vector<8x8xf32>
    %58 = vector.shape_cast %19 : vector<8x1xf32> to vector<8x1xf32>
    %59 = vector.broadcast %58 : vector<8x1xf32> to vector<8x8xf32>
    %60 = arith.select %56, %59, %57 : vector<8x8xi1>, vector<8x8xf32>
    %c1_i32 = arith.constant 1 : i32
    %61 = vector.broadcast %c1_i32 : i32 to vector<8x8xi32>
    %62 = arith.cmpi eq, %54, %61 : vector<8x8xi32>
    %63 = vector.shape_cast %47 : vector<8x1xf32> to vector<8x1xf32>
    %64 = vector.broadcast %63 : vector<8x1xf32> to vector<8x8xf32>
    %65 = arith.select %62, %64, %60 : vector<8x8xi1>, vector<8x8xf32>
    %c2_i32 = arith.constant 2 : i32
    %66 = vector.broadcast %c2_i32 : i32 to vector<8x8xi32>
    %67 = arith.cmpi eq, %54, %66 : vector<8x8xi32>
    %68 = arith.sitofp %38 : vector<8x1xi32> to vector<8x1xf32>
    %69 = vector.shape_cast %68 : vector<8x1xf32> to vector<8x1xf32>
    %70 = vector.broadcast %69 : vector<8x1xf32> to vector<8x8xf32>
    %71 = arith.select %67, %70, %65 : vector<8x8xi1>, vector<8x8xf32>
    %c3_i32 = arith.constant 3 : i32
    %72 = vector.broadcast %c3_i32 : i32 to vector<8x8xi32>
    %73 = arith.cmpi eq, %54, %72 : vector<8x8xi32>
    %74 = vector.shape_cast %53 : vector<8x1xf32> to vector<8x1xf32>
    %75 = vector.broadcast %74 : vector<8x1xf32> to vector<8x8xf32>
    %76 = arith.select %73, %75, %71 : vector<8x8xi1>, vector<8x8xf32>
    %c0_18 = arith.constant 0 : index
    %c0_19 = arith.constant 0 : index
    %77 = vector.load %arg4[%c0_18, %c0_19] : memref<8x8xf32, #tpu.memory_space<vmem>>, vector<8x8xf32>
    tpu.vector_store %arg4[%c0_18, %c0_19], %76 {strides = array<i32>} : memref<8x8xf32, #tpu.memory_space<vmem>>, vector<8x8xf32>,
    return
  }
  func.func @transform_0(%arg0: i32) -> (i32, i32) {
    %c0_i32 = arith.constant 0 : i32
    %c0_i32_0 = arith.constant 0 : i32
    return %arg0, %c0_i32 : i32, i32
  }
  func.func @transform_1(%arg0: i32) -> (i32, i32) {
    %c0_i32 = arith.constant 0 : i32
    %c0_i32_0 = arith.constant 0 : i32
    %c0_i32_1 = arith.constant 0 : i32
    return %c0_i32, %c0_i32_0 : i32, i32
  }
  func.func @transform_2(%arg0: i32) -> (i32, i32) {
    %c0_i32 = arith.constant 0 : i32
    %c0_i32_0 = arith.constant 0 : i32
    %c0_i32_1 = arith.constant 0 : i32
    return %c0_i32, %c0_i32_0 : i32, i32
  }
  func.func @transform_3(%arg0: i32) -> (i32, i32) {
    %c0_i32 = arith.constant 0 : i32
    %c0_i32_0 = arith.constant 0 : i32
    return %arg0, %c0_i32 : i32, i32
  }
}

</mosaic_0001>

<llo_original>
// kernel: tpu_custom_call.1
$region0: #{tpu_custom_call.1}
  #allocation0 [shape = 'u32[]', space=smem, size = 0x4, offset = 0x4, fixed_abs, tag = 'smem constant byte address 0x4 - core index']
  #allocation1 [shape = 'u32[144,128]{1,0:T(1,128)}', space=vmem, size = 0x12000, scoped, tag = 'internal scratch']
  %s0 = inlined_call_operand.hbm [shape: f32[8,24], index: 0, kind: input, shape index: {}]
  %s1 = inlined_call_operand.hbm [shape: f32[280,128], index: 1, kind: input, shape index: {}]
  %s2 = inlined_call_operand.hbm [shape: f32[3,128], index: 2, kind: input, shape index: {}]
  %s3 = inlined_call_operand.hbm [shape: f32[8,8], index: 3, kind: output, shape index: {}]
  %s4 = sld [smem:[#allocation0]]
  $region34: #{tpu_custom_call.1} parent=0
    _
  %s6 = ssub.s32 1, %s4
  %s7 = scalar_select 0, %s6, %s4
  $region1: #{tpu_custom_call.1} parent=0
    #allocation2 [shape = 'u8[4096]{0}', space=vmem, size = 0x1000, scoped, tag = 'input window, operand 0, single buffered']
    #allocation3 [shape = 's32[1]{0}', space=sflag, size = 0x4, scoped, tag = 'scoped memory for tpu_custom_call.1']
    #allocation4 [shape = 's32[1]{0}', space=sflag, size = 0x4, scoped, tag = 'scoped memory for tpu_custom_call.1']
    #allocation5 [shape = 'u8[143360]{0}', space=vmem, size = 0x23000, scoped, tag = 'input window, operand 1, single buffered']
    #allocation6 [shape = 's32[1]{0}', space=sflag, size = 0x4, scoped, tag = 'scoped memory for tpu_custom_call.1']
    #allocation7 [shape = 'u8[2048]{0}', space=vmem, size = 0x800, scoped, tag = 'input window, operand 2, single buffered']
    #allocation8 [shape = 'u8[4096]{0}', space=vmem, size = 0x1000, scoped, tag = 'output window, operand 0, single buffered']
    %8 = vsyncpa [#allocation3], 0
    %9 = vsyncpa [#allocation6], 0
    %10 = vsyncpa [#allocation4], 0
    // Predicated region
    $region2: #{tpu_custom_call.1} parent=1 // pred_check
      _
    $region3: #{tpu_custom_call.1} parent=1 // pred_check_branch
      %12 = sbr.rel (0) target = $region5
    $region4: #{tpu_custom_call.1} parent=1 // pred_region
      %s14 = ssub.s32 128, 128
      %15 = vsyncadd [#allocation3], %s14
      %s17 = sshll.u32 [#allocation2], 4
      %s18 = int_to_ptr.vmem [resolvable:$true] %s17
      %20 = dma.hbm_to_vmem [thread:$0]  %s0, 128, %s18, [#allocation3]
    $region5: #{tpu_custom_call.1} parent=1 // pred_fallthru
      _
    // Predicated region
    $region6: #{tpu_custom_call.1} parent=1 // pred_check
      _
    $region7: #{tpu_custom_call.1} parent=1 // pred_check_branch
      %22 = sbr.rel (0) target = $region9
    $region8: #{tpu_custom_call.1} parent=1 // pred_region
      %s24 = ssub.s32 4480, 4480
      %25 = vsyncadd [#allocation6], %s24
      %s26 = sshll.u32 [#allocation5], 4
      %s27 = int_to_ptr.vmem [resolvable:$true] %s26
      %32 = dma.hbm_to_vmem [thread:$0]  %s1, 4480, %s27, [#allocation6], 128, 128, 8
    $region9: #{tpu_custom_call.1} parent=1 // pred_fallthru
      _
    // Predicated region
    $region10: #{tpu_custom_call.1} parent=1 // pred_check
      _
    $region11: #{tpu_custom_call.1} parent=1 // pred_check_branch
      %34 = sbr.rel (0) target = $region13
    $region12: #{tpu_custom_call.1} parent=1 // pred_region
      %s36 = ssub.s32 64, 64
      %37 = vsyncadd [#allocation6], %s36
      %s39 = sshll.u32 [#allocation7], 4
      %s40 = int_to_ptr.vmem [resolvable:$true] %s39
      %42 = dma.hbm_to_vmem [thread:$0]  %s2, 64, %s40, [#allocation6]
    $region13: #{tpu_custom_call.1} parent=1 // pred_fallthru
      _
    // Predicated region
    $region14: #{tpu_custom_call.1} parent=1 // pred_check
      _
    $region15: #{tpu_custom_call.1} parent=1 // pred_check_branch
      %44 = sbr.rel (0) target = $region17
    $region16: #{tpu_custom_call.1} parent=1 // pred_region
      %45 = dma.done [#allocation3], 128
    $region17: #{tpu_custom_call.1} parent=1 // pred_fallthru
      _
    // Predicated region
    $region18: #{tpu_custom_call.1} parent=1 // pred_check
      _
    $region19: #{tpu_custom_call.1} parent=1 // pred_check_branch
      %47 = sbr.rel (0) target = $region21
    $region20: #{tpu_custom_call.1} parent=1 // pred_region
      %48 = dma.done [#allocation6], 4480
    $region21: #{tpu_custom_call.1} parent=1 // pred_fallthru
      _
    // Predicated region
    $region22: #{tpu_custom_call.1} parent=1 // pred_check
      _
    $region23: #{tpu_custom_call.1} parent=1 // pred_check_branch
      %50 = sbr.rel (0) target = $region25
    $region24: #{tpu_custom_call.1} parent=1 // pred_region
      %51 = dma.done [#allocation6], 64
    $region25: #{tpu_custom_call.1} parent=1 // pred_fallthru
      _
    %v52 = vld [vmem:[#allocation5] sm:$0xff]
    %v53 = vld [vmem:[#allocation5 + $0x8] sm:$0xff]
    %v54 = vld [vmem:[#allocation5 + $0x10] sm:$0xff]
    %v55 = vld [vmem:[#allocation5 + $0x18] sm:$0xff]
    %v56 = vld [vmem:[#allocation5 + $0x20] sm:$0xff]
    %v57 = vld [vmem:[#allocation5 + $0x28] sm:$0xff]
    %v58 = vld [vmem:[#allocation5 + $0x30] sm:$0xff]
    %v59 = vld [vmem:[#allocation5 + $0x38] sm:$0xff]
    %v60 = vld [vmem:[#allocation5 + $0x40] sm:$0xff]
    %v61 = vld [vmem:[#allocation5 + $0x48] sm:$0xff]
    %v62 = vld [vmem:[#allocation5 + $0x50] sm:$0xff]
    %v63 = vld [vmem:[#allocation5 + $0x58] sm:$0xff]
    %v64 = vld [vmem:[#allocation5 + $0x60] sm:$0xff]
    %v65 = vld [vmem:[#allocation5 + $0x68] sm:$0xff]
    %v66 = vld [vmem:[#allocation5 + $0x70] sm:$0xff]
    %v67 = vld [vmem:[#allocation5 + $0x78] sm:$0xff]
    %v68 = vld [vmem:[#allocation5 + $0x80] sm:$0xff]
    %v69 = vld [vmem:[#allocation5 + $0x88] sm:$0xff]
    %v70 = vld [vmem:[#allocation5 + $0x90] sm:$0xff]
    %v71 = vld [vmem:[#allocation5 + $0x98] sm:$0xff]
    %v72 = vld [vmem:[#allocation5 + $0xa0] sm:$0xff]
    %v73 = vld [vmem:[#allocation5 + $0xa8] sm:$0xff]
    %v74 = vld [vmem:[#allocation5 + $0xb0] sm:$0xff]
    %v75 = vld [vmem:[#allocation5 + $0xb8] sm:$0xff]
    %v76 = vld [vmem:[#allocation5 + $0xc0] sm:$0xff]
    %v77 = vld [vmem:[#allocation5 + $0xc8] sm:$0xff]
    %v78 = vld [vmem:[#allocation5 + $0xd0] sm:$0xff]
    %v79 = vld [vmem:[#allocation5 + $0xd8] sm:$0xff]
    %v80 = vld [vmem:[#allocation5 + $0xe0] sm:$0xff]
    %v81 = vld [vmem:[#allocation5 + $0xe8] sm:$0xff]
    %v82 = vld [vmem:[#allocation5 + $0xf0] sm:$0xff]
    %v83 = vld [vmem:[#allocation5 + $0xf8] sm:$0xff]
    %v84 = vld [vmem:[#allocation5 + $0x100] sm:$0xff]
    %v85 = vld [vmem:[#allocation5 + $0x108] sm:$0xff]
    %v86 = vld [vmem:[#allocation5 + $0x110] sm:$0xff]
    %v87 = vld [vmem:[#allocation7] sm:$0x1]
    %v88 = vld [vmem:[#allocation7 + $0x1] sm:$0x1]
    %v89 = vld [vmem:[#allocation7 + $0x2] sm:$0x1]
    %v90 = vld [vmem:[#allocation2] sm:$0xff]
    %v91 = vlaneseq
    %v92 = vshrl.u32 %v91, 7
    %v93 = vsub.s32 0, %v92
    %v94 = vrot.slane %v87, %v93
    %vm95 = vcmask 195584
    %v97 = vsel %vm95, %v90, 0
    %99 = vmatprep.subr.mxu0 0.0
    %100 = vmatpush1.msra.mxu0 0.0
    %101 = vmatprep.subr.mxu0 0.0
    %102 = vmatpush1.msra.mxu0 0.0
    %103 = vmatprep.subr.mxu0 0.0
    %104 = vmatpush1.msra.mxu0 0.0
    %105 = vmatprep.subr.mxu0 0.0
    %106 = vmatpush1.msra.mxu0 0.0
    %107 = vmatprep.subr.mxu0 0.0
    %108 = vmatpush1.msra.mxu0 0.0
    %109 = vmatprep.subr.mxu0 0.0
    %110 = vmatpush1.msra.mxu0 0.0
    %111 = vmatprep.subr.mxu0 0.0
    %112 = vmatpush1.msra.mxu0 0.0
    %113 = vmatprep.subr.mxu0 0.0
    %114 = vmatpush1.msra.mxu0 0.0
    %115 = vmatprep.subr.mxu0 0.0
    %116 = vmatpush1.msra.mxu0 0.0
    %117 = vmatprep.subr.mxu0 0.0
    %118 = vmatpush1.msra.mxu0 0.0
    %119 = vmatprep.subr.mxu0 0.0
    %120 = vmatpush1.msra.mxu0 0.0
    %121 = vmatprep.subr.mxu0 0.0
    %122 = vmatpush1.msra.mxu0 0.0
    %123 = vmatprep.subr.mxu0 0.0
    %124 = vmatpush1.msra.mxu0 0.0
    %125 = vmatprep.subr.mxu0 0.0
    %126 = vmatpush1.msra.mxu0 %v54
    %127 = vmatprep.subr.mxu0 0.0
    %128 = vmatpush1.msra.mxu0 %v53
    %129 = vmatprep.subr.mxu0 0.0
    %130 = vmatpush1.msra.mxu0 %v52
    %131 = vmatprep.subr.mxu0 0.0
    %132 = vmatpush2.msra.mxu0 0.0
    %133 = vmatprep.subr.mxu0 0.0
    %134 = vmatpush2.msra.mxu0 0.0
    %135 = vmatprep.subr.mxu0 0.0
    %136 = vmatpush2.msra.mxu0 0.0
    %137 = vmatprep.subr.mxu0 0.0
    %138 = vmatpush2.msra.mxu0 0.0
    %139 = vmatprep.subr.mxu0 0.0
    %140 = vmatpush2.msra.mxu0 0.0
    %141 = vmatprep.subr.mxu0 0.0
    %142 = vmatpush2.msra.mxu0 0.0
    %143 = vmatprep.subr.mxu0 0.0
    %144 = vmatpush2.msra.mxu0 0.0
    %145 = vmatprep.subr.mxu0 0.0
    %146 = vmatpush2.msra.mxu0 0.0
    %147 = vmatprep.subr.mxu0 0.0
    %148 = vmatpush2.msra.mxu0 0.0
    %149 = vmatprep.subr.mxu0 0.0
    %150 = vmatpush2.msra.mxu0 0.0
    %151 = vmatprep.subr.mxu0 0.0
    %152 = vmatpush2.msra.mxu0 0.0
    %153 = vmatprep.subr.mxu0 0.0
    %154 = vmatpush2.msra.mxu0 0.0
    %155 = vmatprep.subr.mxu0 0.0
    %156 = vmatpush2.msra.mxu0 0.0
    %157 = vmatprep.subr.mxu0 0.0
    %158 = vmatpush2.msra.mxu0 0.0
    %159 = vmatprep.subr.mxu0 0.0
    %160 = vmatpush2.msra.mxu0 0.0
    %161 = vmatprep.subr.mxu0 0.0
    %162 = vmatpush2.msra.mxu0 0.0
    %163 = vmatprep.mubr.f32.mxu0 0.0
    %164 = vmatmul.mubr.f32.gmra.mxu0 %v97
    %v165 = vpop.f32.mrf.mxu0
    %v166 = vadd.f32 %v94, %v165
    %v167 = vpop.f32.mrf.mxu0
    %168 = vdwg.mxu0
    %v169 = vtanh.pop %v166
    %v170 = vlaneseq
    %v171 = vshrl.u32 %v170, 7
    %v172 = vsub.s32 0, %v171
    %v173 = vrot.slane %v88, %v172
    %174 = vmatprep.subr.mxu0 0.0
    %175 = vmatpush1.msra.mxu0 %v70
    %176 = vmatprep.subr.mxu0 0.0
    %177 = vmatpush1.msra.mxu0 %v69
    %178 = vmatprep.subr.mxu0 0.0
    %179 = vmatpush1.msra.mxu0 %v68
    %180 = vmatprep.subr.mxu0 0.0
    %181 = vmatpush1.msra.mxu0 %v67
    %182 = vmatprep.subr.mxu0 0.0
    %183 = vmatpush1.msra.mxu0 %v66
    %184 = vmatprep.subr.mxu0 0.0
    %185 = vmatpush1.msra.mxu0 %v65
    %186 = vmatprep.subr.mxu0 0.0
    %187 = vmatpush1.msra.mxu0 %v64
    %188 = vmatprep.subr.mxu0 0.0
    %189 = vmatpush1.msra.mxu0 %v63
    %190 = vmatprep.subr.mxu0 0.0
    %191 = vmatpush1.msra.mxu0 %v62
    %192 = vmatprep.subr.mxu0 0.0
    %193 = vmatpush1.msra.mxu0 %v61
    %194 = vmatprep.subr.mxu0 0.0
    %195 = vmatpush1.msra.mxu0 %v60
    %196 = vmatprep.subr.mxu0 0.0
    %197 = vmatpush1.msra.mxu0 %v59
    %198 = vmatprep.subr.mxu0 0.0
    %199 = vmatpush1.msra.mxu0 %v58
    %200 = vmatprep.subr.mxu0 0.0
    %201 = vmatpush1.msra.mxu0 %v57
    %202 = vmatprep.subr.mxu0 0.0
    %203 = vmatpush1.msra.mxu0 %v56
    %204 = vmatprep.subr.mxu0 0.0
    %205 = vmatpush1.msra.mxu0 %v55
    %206 = vmatprep.subr.mxu0 0.0
    %207 = vmatpush2.msra.mxu0 0.0
    %208 = vmatprep.subr.mxu0 0.0
    %209 = vmatpush2.msra.mxu0 0.0
    %210 = vmatprep.subr.mxu0 0.0
    %211 = vmatpush2.msra.mxu0 0.0
    %212 = vmatprep.subr.mxu0 0.0
    %213 = vmatpush2.msra.mxu0 0.0
    %214 = vmatprep.subr.mxu0 0.0
    %215 = vmatpush2.msra.mxu0 0.0
    %216 = vmatprep.subr.mxu0 0.0
    %217 = vmatpush2.msra.mxu0 0.0
    %218 = vmatprep.subr.mxu0 0.0
    %219 = vmatpush2.msra.mxu0 0.0
    %220 = vmatprep.subr.mxu0 0.0
    %221 = vmatpush2.msra.mxu0 0.0
    %222 = vmatprep.subr.mxu0 0.0
    %223 = vmatpush2.msra.mxu0 0.0
    %224 = vmatprep.subr.mxu0 0.0
    %225 = vmatpush2.msra.mxu0 0.0
    %226 = vmatprep.subr.mxu0 0.0
    %227 = vmatpush2.msra.mxu0 0.0
    %228 = vmatprep.subr.mxu0 0.0
    %229 = vmatpush2.msra.mxu0 0.0
    %230 = vmatprep.subr.mxu0 0.0
    %231 = vmatpush2.msra.mxu0 0.0
    %232 = vmatprep.subr.mxu0 0.0
    %233 = vmatpush2.msra.mxu0 0.0
    %234 = vmatprep.subr.mxu0 0.0
    %235 = vmatpush2.msra.mxu0 0.0
    %236 = vmatprep.subr.mxu0 0.0
    %237 = vmatpush2.msra.mxu0 0.0
    %238 = vmatprep.mubr.f32.mxu0 0.0
    %239 = vmatmul.mubr.f32.gmra.mxu0 %v169
    %v240 = vpop.f32.mrf.mxu0
    %v241 = vadd.f32 %v173, %v240
    %v242 = vpop.f32.mrf.mxu0
    %243 = vdwg.mxu0
    %v244 = vtanh.pop %v241
    %v245 = vlaneseq
    %v246 = vshrl.u32 %v245, 7
    %v247 = vsub.s32 0, %v246
    %v248 = vrot.slane %v89, %v247
    %249 = vmatprep.subr.mxu0 0.0
    %250 = vmatpush1.msra.mxu0 %v86
    %251 = vmatprep.subr.mxu0 0.0
    %252 = vmatpush1.msra.mxu0 %v85
    %253 = vmatprep.subr.mxu0 0.0
    %254 = vmatpush1.msra.mxu0 %v84
    %255 = vmatprep.subr.mxu0 0.0
    %256 = vmatpush1.msra.mxu0 %v83
    %257 = vmatprep.subr.mxu0 0.0
    %258 = vmatpush1.msra.mxu0 %v82
    %259 = vmatprep.subr.mxu0 0.0
    %260 = vmatpush1.msra.mxu0 %v81
    %261 = vmatprep.subr.mxu0 0.0
    %262 = vmatpush1.msra.mxu0 %v80
    %263 = vmatprep.subr.mxu0 0.0
    %264 = vmatpush1.msra.mxu0 %v79
    %265 = vmatprep.subr.mxu0 0.0
    %266 = vmatpush1.msra.mxu0 %v78
    %267 = vmatprep.subr.mxu0 0.0
    %268 = vmatpush1.msra.mxu0 %v77
    %269 = vmatprep.subr.mxu0 0.0
    %270 = vmatpush1.msra.mxu0 %v76
    %271 = vmatprep.subr.mxu0 0.0
    %272 = vmatpush1.msra.mxu0 %v75
    %273 = vmatprep.subr.mxu0 0.0
    %274 = vmatpush1.msra.mxu0 %v74
    %275 = vmatprep.subr.mxu0 0.0
    %276 = vmatpush1.msra.mxu0 %v73
    %277 = vmatprep.subr.mxu0 0.0
    %278 = vmatpush1.msra.mxu0 %v72
    %279 = vmatprep.subr.mxu0 0.0
    %280 = vmatpush1.msra.mxu0 %v71
    %281 = vmatprep.subr.mxu0 0.0
    %282 = vmatpush2.msra.mxu0 0.0
    %283 = vmatprep.subr.mxu0 0.0
    %284 = vmatpush2.msra.mxu0 0.0
    %285 = vmatprep.subr.mxu0 0.0
    %286 = vmatpush2.msra.mxu0 0.0
    %287 = vmatprep.subr.mxu0 0.0
    %288 = vmatpush2.msra.mxu0 0.0
    %289 = vmatprep.subr.mxu0 0.0
    %290 = vmatpush2.msra.mxu0 0.0
    %291 = vmatprep.subr.mxu0 0.0
    %292 = vmatpush2.msra.mxu0 0.0
    %293 = vmatprep.subr.mxu0 0.0
    %294 = vmatpush2.msra.mxu0 0.0
    %295 = vmatprep.subr.mxu0 0.0
    %296 = vmatpush2.msra.mxu0 0.0
    %297 = vmatprep.subr.mxu0 0.0
    %298 = vmatpush2.msra.mxu0 0.0
    %299 = vmatprep.subr.mxu0 0.0
    %300 = vmatpush2.msra.mxu0 0.0
    %301 = vmatprep.subr.mxu0 0.0
    %302 = vmatpush2.msra.mxu0 0.0
    %303 = vmatprep.subr.mxu0 0.0
    %304 = vmatpush2.msra.mxu0 0.0
    %305 = vmatprep.subr.mxu0 0.0
    %306 = vmatpush2.msra.mxu0 0.0
    %307 = vmatprep.subr.mxu0 0.0
    %308 = vmatpush2.msra.mxu0 0.0
    %309 = vmatprep.subr.mxu0 0.0
    %310 = vmatpush2.msra.mxu0 0.0
    %311 = vmatprep.subr.mxu0 0.0
    %312 = vmatpush2.msra.mxu0 0.0
    %313 = vmatprep.mubr.f32.mxu0 0.0
    %314 = vmatmul.mubr.f32.gmra.mxu0 %v244
    %v315 = vpop.f32.mrf.mxu0
    %v316 = vadd.f32 %v248, %v315
    %v317 = vpop.f32.mrf.mxu0
    %318 = vdwg.mxu0
    %vm319 = vcmask 48128
    %v320 = vsel %vm319, %v316, -inf
    %321 = vmax.xlane.f32.xlu0 %v320
    %v322 = vpop.xlane.xlu0 %321
    %v323 = vsub.f32 %v316, %v322
    %v324 = vmul.f32 %v323, 1.442695
    %v325 = vpow.pop %v324
    %v326 = vsel %vm319, %v325, 0.0
    %327 = vadd.xlane.f32.xlu0 %v326
    %v328 = vpop.xlane.xlu0 %327
    %v329 = vlog2.pop %v328
    %v330 = vmul.f32 %v329, 0.6931472
    %v331 = vsub.f32 %v323, %v330
    %v332 = vlaneseq
    %v333 = vand.u32 %v332, 127
    %vm334 = vcmp.eq.f32.partialorder %v316, %v322
    %v335 = vsel %vm334, %v333, 6
    %v336 = vsel %vm319, %v335, 2147483647
    %v337 = vand.u32 %v336, 65535
    %v338 = vshra.s32 %v336, 16
    %v339 = vcvt.s32.f32 %v337
    %v340 = vcvt.s32.f32 %v338
    %341 = vmin.xlane.f32.xlu0 %v340
    %v342 = vpop.xlane.xlu0 %341
    %vm343 = vcmp.eq.f32.partialorder %v340, %v342
    %v344 = vsel %vm343, %v339, inf
    %345 = vmin.xlane.f32.xlu0 %v344
    %v346 = vpop.xlane.xlu0 %345
    %v347 = vcvt.f32.s32 %v346
    %v348 = vcvt.f32.s32 %v342
    %v349 = vshll.u32 %v348, 16
    %v350 = vadd.s32 %v349, %v347
    %vm351 = vcmp.lt.s32.totalorder %v350, 5
    %v352 = vsel %vm351, %v350, 5
    %353 = vset.pattern.permute.xlu0 16
    %354 = vperm.xlu0 %353, %v90
    %v355 = vpop.permute.xlu0 %354
    %vm356 = vcmp.eq.s32.totalorder %v333, %v355
    %v357 = vsel %vm356, 1, 0
    %v358 = vcvt.s32.f32 %v357
    %v359 = vmul.f32 %v331, %v358
    %v360 = vsel %vm319, %v359, 0.0
    %361 = vadd.xlane.f32.xlu0 %v360
    %v362 = vpop.xlane.xlu0 %361
    %v363 = vmul.f32 %v325, %v331
    %v364 = vsel %vm319, %v363, 0.0
    %365 = vadd.xlane.f32.xlu0 %v364
    %v366 = vpop.xlane.xlu0 %365
    %v367 = vsub.f32 0.0, %v366
    %v368 = vrcp.pop %v328
    %v369 = vmul.f32 %v367, %v368
    %vm370 = vcmp.eq.s32.totalorder %v333, 0
    %372 = vset.pattern.permute.xlu0 6
    %373 = vperm.xlu0 %372, %v316
    %v374 = vpop.permute.xlu0 %373
    %v376 = vsel %vm370, %v374, 0.0
    %vm377 = vcmp.eq.s32.totalorder %v333, 1
    %v378 = vsel %vm377, %v362, %v376
    %vm379 = vcmp.eq.s32.totalorder %v333, 2
    %v380 = vcvt.s32.f32 %v352
    %v381 = vsel %vm379, %v380, %v378
    %vm382 = vcmp.eq.s32.totalorder %v333, 3
    %v383 = vsel %vm382, %v369, %v381
    %vm384 = vcmask 64512
    %385 = vst.msk [vmem:[#allocation8] sm:$0xff] %vm384, %v383
    // Predicated region
    $region26: #{tpu_custom_call.1} parent=1 // pred_check
      _
    $region27: #{tpu_custom_call.1} parent=1 // pred_check_branch
      %387 = sbr.rel (0) target = $region29
    $region28: #{tpu_custom_call.1} parent=1 // pred_region
      %s389 = ssub.s32 128, 128
      %390 = vsyncadd [#allocation4], %s389
      %s392 = sshll.u32 [#allocation8], 4
      %s393 = int_to_ptr.vmem [resolvable:$true] %s392
      %395 = dma.vmem_to_hbm [thread:$0]  %s393, 128, %s3, [#allocation4]
    $region29: #{tpu_custom_call.1} parent=1 // pred_fallthru
      _
    // Predicated region
    $region30: #{tpu_custom_call.1} parent=1 // pred_check
      _
    $region31: #{tpu_custom_call.1} parent=1 // pred_check_branch
      %397 = sbr.rel (0) target = $region33
    $region32: #{tpu_custom_call.1} parent=1 // pred_region
      %398 = dma.done [#allocation4], 128
    $region33: #{tpu_custom_call.1} parent=1 // pred_fallthru
      _
    %399 = vsyncpa [#allocation3], 1
    %400 = vsyncpa [#allocation6], 1
    %401 = vsyncpa [#allocation4], 1

</llo_original>
